<compile_context>
chip_gen: v6e
topology: v6e:2x2x1
jax: 0.10.0
libtpu: 0.0.40
codegen_flags: <defaults>
</compile_context>

<pallas_src>
import functools

import jax
import jax.numpy as jnp
from jax import lax
from jax.experimental import pallas as pl
from jax.experimental.pallas import tpu as pltpu


def basic_block_kernel(x_ref, w1_ref, b1_ref, w2_ref, b2_ref, o_ref, *,
                       true_len, mm_dtype):
    """One grid step: TN samples, full (padded) length, all channels.

    x_ref : (TN, Cin, Lp)  f32
    w1_ref: (Cout, 3*Cin)  conv1 weight, BN1 scale folded, taps stacked on axis 1
    b1_ref: (Cout, 1)      BN1 folded bias (beta - mean*scale)
    w2_ref: (Cout, 3*Cout) conv2 weight, BN2 scale folded
    b2_ref: (Cout, 1)      BN2 folded bias
    o_ref : (TN, Cout, Lp) f32
    """
    tn, _, lp = x_ref.shape

    # Boundary masks along the lane (L) axis -- computed once, reused by both convs
    # and all samples.  Only the *true* sequence ends are zeroed (conv zero padding);
    # positions >= true_len are padded garbage and are sliced off in the wrapper.
    pos = lax.broadcasted_iota(jnp.int32, (1, lp), 1)
    not_first = pos != 0
    not_last = pos != (true_len - 1)

    w1 = w1_ref[...]
    w2 = w2_ref[...]
    b1 = b1_ref[...]
    b2 = b2_ref[...]

    def conv3(inp, w):
        # inp: (C, Lp) f32, w: (Cout, 3*C).  K=3 / pad=1 / stride=1 conv as a single
        # MXU matmul: stack [x_{l-1}; x_l; x_{l+1}] along the contraction axis.
        prev = jnp.where(not_first, pltpu.roll(inp, shift=1, axis=1), 0.0)
        nxt = jnp.where(not_last, pltpu.roll(inp, shift=lp - 1, axis=1), 0.0)
        stacked = jnp.concatenate([prev, inp, nxt], axis=0).astype(mm_dtype)
        return jnp.dot(w, stacked, preferred_element_type=jnp.float32)  # (Cout, Lp)

    for i in range(tn):                                   # static unroll over tile
        xi = x_ref[i]                                     # (Cin, Lp)
        h = jnp.maximum(conv3(xi, w1) + b1, 0.0)          # conv1 -> bn1 -> relu
        h2 = conv3(h, w2) + b2                            # conv2 -> bn2
        o_ref[i] = jnp.maximum(h2 + xi, 0.0)              # identity residual + relu


def _pick_tile_n(n, cin, lp, bytes_per_elem=4, block_budget=4 << 20):
    """Largest divisor of n that (a) leaves >= 2 grid steps (v7x has 2 TCs) and
    (b) keeps the double-buffered input block comfortably inside scoped VMEM."""
    cap = max(1, n // 2)
    tn = 1
    for cand in range(1, cap + 1):
        if n % cand == 0 and cand * cin * lp * bytes_per_elem <= block_budget:
            tn = cand
    return tn


def basic_block_forward(x_ncl, params, *, matmul_dtype=jnp.float32):
    """x_ncl: (N, Cin, L) float32 (PyTorch NCL layout). Returns (N, Cout, L)."""
    N, Cin, L = x_ncl.shape
    Cout = params["w1"].shape[0]
    assert Cin == Cout, "identity residual requires inplanes == planes (downsample=None)"

    # Fold eval-mode BatchNorm into the conv weights (scale) and a per-channel bias.
    eps = 1e-5
    s1 = params["g1"] / jnp.sqrt(params["v1"] + eps)
    s2 = params["g2"] / jnp.sqrt(params["v2"] + eps)
    b1 = (params["b1"] - params["m1"] * s1)[:, None]        # (Cout, 1)
    b2 = (params["b2"] - params["m2"] * s2)[:, None]        # (Cout, 1)

    # (Cout, Cin, 3) -> fused per-tap matrix (Cout, 3*Cin); column blocks are
    # [tap k=0 (x_{l-1}), tap k=1 (x_l), tap k=2 (x_{l+1})] to match the kernel stack.
    w1 = (params["w1"] * s1[:, None, None])
    w1 = jnp.transpose(w1, (0, 2, 1)).reshape(Cout, 3 * Cin).astype(matmul_dtype)
    w2 = (params["w2"] * s2[:, None, None])
    w2 = jnp.transpose(w2, (0, 2, 1)).reshape(Cout, 3 * Cout).astype(matmul_dtype)

    # Lane-align the sequence axis so loads/stores are unmasked (lane-dense).
    Lp = ((L + 127) // 128) * 128
    x_p = jnp.pad(x_ncl, ((0, 0), (0, 0), (0, Lp - L))) if Lp != L else x_ncl

    TN = _pick_tile_n(N, Cin, Lp)
    grid = (N // TN,)

    kernel = functools.partial(basic_block_kernel, true_len=L, mm_dtype=matmul_dtype)

    out = pl.pallas_call(
        kernel,
        out_shape=jax.ShapeDtypeStruct((N, Cout, Lp), jnp.float32),
        grid_spec=pltpu.PrefetchScalarGridSpec(
            num_scalar_prefetch=0,
            grid=grid,
            in_specs=[
                pl.BlockSpec((TN, Cin, Lp), lambda n: (n, 0, 0)),
                pl.BlockSpec((Cout, 3 * Cin), lambda n: (0, 0)),
                pl.BlockSpec((Cout, 1), lambda n: (0, 0)),
                pl.BlockSpec((Cout, 3 * Cout), lambda n: (0, 0)),
                pl.BlockSpec((Cout, 1), lambda n: (0, 0)),
            ],
            out_specs=pl.BlockSpec((TN, Cout, Lp), lambda n: (n, 0, 0)),
        ),
        compiler_params=pltpu.CompilerParams(dimension_semantics=("parallel",)),
    )(x_p, w1, b1, w2, b2)

    return out[:, :, :L] if Lp != L else out


def init_params(key, inplanes, planes):
    ks = jax.random.split(key, 10)
    return {
        "w1": jax.random.normal(ks[0], (planes, inplanes, 3), jnp.float32) * 0.2,
        "g1": jax.random.uniform(ks[1], (planes,), jnp.float32, 0.5, 1.5),
        "b1": jax.random.normal(ks[2], (planes,), jnp.float32) * 0.1,
        "m1": jax.random.normal(ks[3], (planes,), jnp.float32) * 0.1,
        "v1": jax.random.uniform(ks[4], (planes,), jnp.float32, 0.5, 1.5),
        "w2": jax.random.normal(ks[5], (planes, planes, 3), jnp.float32) * 0.2,
        "g2": jax.random.uniform(ks[6], (planes,), jnp.float32, 0.5, 1.5),
        "b2": jax.random.normal(ks[7], (planes,), jnp.float32) * 0.1,
        "m2": jax.random.normal(ks[8], (planes,), jnp.float32) * 0.05,
        "v2": jax.random.uniform(ks[9], (planes,), jnp.float32, 0.5, 1.5),
    }


def reference_forward(x_ncl, params):
    """Pure-JAX reference matching PyTorch eval-mode BasicBlock (stride=1, no downsample)."""
    eps = 1e-5

    def conv1d(x, w):
        return lax.conv_general_dilated(
            x, w, window_strides=(1,), padding=((1, 1),),
            dimension_numbers=("NCH", "OIH", "NCH"))

    def bn(x, g, b, m, v):
        return (x - m[None, :, None]) / jnp.sqrt(v[None, :, None] + eps) \
               * g[None, :, None] + b[None, :, None]

    h = jnp.maximum(bn(conv1d(x_ncl, params["w1"]),
                       params["g1"], params["b1"], params["m1"], params["v1"]), 0.0)
    h2 = bn(conv1d(h, params["w2"]),
            params["g2"], params["b2"], params["m2"], params["v2"])
    return jnp.maximum(h2 + x_ncl, 0.0)


if __name__ == "__main__":
    N, C, L = 4, 8, 128                    # batch, channels (inplanes=planes), length
    key = jax.random.PRNGKey(0)
    kx, kp = jax.random.split(key)
    x = jax.random.normal(kx, (N, C, L), jnp.float32)
    params = init_params(kp, C, C)

    out = jax.block_until_ready(basic_block_forward(x, params))

    ref = reference_forward(x, params)
    assert out.shape == ref.shape == (N, C, L)
    assert jnp.allclose(out, ref, atol=1e-4, rtol=1e-4), \
        f"max err {jnp.max(jnp.abs(out - ref))}"
    print("KERNEL_OK")
</pallas_src>

<mosaic_0001>
module attributes {stable_mosaic.version = 11 : i64} {
  func.func @basic_block_kernel(%arg0: i32, %arg1: memref<2x8x128xf32, #tpu.memory_space<vmem>>, %arg2: memref<8x24xf32, #tpu.memory_space<vmem>>, %arg3: memref<8x1xf32, #tpu.memory_space<vmem>>, %arg4: memref<8x24xf32, #tpu.memory_space<vmem>>, %arg5: memref<8x1xf32, #tpu.memory_space<vmem>>, %arg6: memref<2x8x128xf32, #tpu.memory_space<vmem>>) attributes {dimension_semantics = [#tpu.dimension_semantics<parallel>], iteration_bounds = array<i64: 2>, scalar_prefetch = 0 : i64, scratch_operands = 0 : i64, tpu.core_type = #tpu.core_type<tc>, window_params = [{transform_indices = @transform_0, window_bounds = array<i64: 2, 8, 128>}, {pipeline_mode = #tpu.pipeline_mode<synchronous>, transform_indices = @transform_1, window_bounds = array<i64: 8, 24>}, {pipeline_mode = #tpu.pipeline_mode<synchronous>, transform_indices = @transform_2, window_bounds = array<i64: 8, 1>}, {pipeline_mode = #tpu.pipeline_mode<synchronous>, transform_indices = @transform_3, window_bounds = array<i64: 8, 24>}, {pipeline_mode = #tpu.pipeline_mode<synchronous>, transform_indices = @transform_4, window_bounds = array<i64: 8, 1>}, {transform_indices = @transform_5, window_bounds = array<i64: 2, 8, 128>}]} {
    %0 = tpu.iota {dimensions = array<i32: 1>} : vector<1x128xi32>
    %c0_i32 = arith.constant 0 : i32
    %1 = vector.broadcast %c0_i32 : i32 to vector<1x128xi32>
    %2 = arith.cmpi ne, %0, %1 : vector<1x128xi32>
    %c127_i32 = arith.constant 127 : i32
    %3 = vector.broadcast %c127_i32 : i32 to vector<1x128xi32>
    %4 = arith.cmpi ne, %0, %3 : vector<1x128xi32>
    %c0 = arith.constant 0 : index
    %c0_0 = arith.constant 0 : index
    %5 = vector.load %arg2[%c0, %c0_0] : memref<8x24xf32, #tpu.memory_space<vmem>>, vector<8x24xf32>
    %c0_1 = arith.constant 0 : index
    %c0_2 = arith.constant 0 : index
    %6 = vector.load %arg4[%c0_1, %c0_2] : memref<8x24xf32, #tpu.memory_space<vmem>>, vector<8x24xf32>
    %c0_3 = arith.constant 0 : index
    %c0_4 = arith.constant 0 : index
    %7 = vector.load %arg3[%c0_3, %c0_4] : memref<8x1xf32, #tpu.memory_space<vmem>>, vector<8x1xf32>
    %c0_5 = arith.constant 0 : index
    %c0_6 = arith.constant 0 : index
    %8 = vector.load %arg5[%c0_5, %c0_6] : memref<8x1xf32, #tpu.memory_space<vmem>>, vector<8x1xf32>
    %c0_7 = arith.constant 0 : index
    %c0_8 = arith.constant 0 : index
    %c0_9 = arith.constant 0 : index
    %9 = vector.load %arg1[%c0_7, %c0_8, %c0_9] : memref<2x8x128xf32, #tpu.memory_space<vmem>>, vector<1x8x128xf32>
    %10 = vector.shape_cast %9 : vector<1x8x128xf32> to vector<8x128xf32>
    %c1_i32 = arith.constant 1 : i32
    %11 = tpu.dynamic_rotate %10 by %c1_i32 dim 1 : vector<8x128xf32>, i32 -> vector<8x128xf32>
    %cst = arith.constant 0.000000e+00 : f32
    %12 = vector.shape_cast %2 : vector<1x128xi1> to vector<1x128xi1>
    %13 = vector.broadcast %12 : vector<1x128xi1> to vector<8x128xi1>
    %14 = vector.broadcast %cst : f32 to vector<8x128xf32>
    %15 = arith.select %13, %11, %14 : vector<8x128xi1>, vector<8x128xf32>
    %c127_i32_10 = arith.constant 127 : i32
    %16 = tpu.dynamic_rotate %10 by %c127_i32_10 dim 1 : vector<8x128xf32>, i32 -> vector<8x128xf32>
    %cst_11 = arith.constant 0.000000e+00 : f32
    %17 = vector.shape_cast %4 : vector<1x128xi1> to vector<1x128xi1>
    %18 = vector.broadcast %17 : vector<1x128xi1> to vector<8x128xi1>
    %19 = vector.broadcast %cst_11 : f32 to vector<8x128xf32>
    %20 = arith.select %18, %16, %19 : vector<8x128xi1>, vector<8x128xf32>
    %21 = tpu.concatenate %15, %10, %20 in 0 : vector<8x128xf32>, vector<8x128xf32>, vector<8x128xf32> -> vector<24x128xf32>
    %cst_12 = arith.constant dense<0.000000e+00> : vector<8x128xf32>
    %22 = tpu.matmul %5, %21, %cst_12 {dimension_numbers = #tpu.dot_dimension_numbers<[1], [0], [0], [1], [0, 0, 1, 1], [], []>} : vector<8x24xf32>, vector<24x128xf32>, vector<8x128xf32> -> vector<8x128xf32>
    %23 = vector.broadcast %7 : vector<8x1xf32> to vector<8x128xf32>
    %24 = arith.addf %22, %23 : vector<8x128xf32>
    %cst_13 = arith.constant 0.000000e+00 : f32
    %25 = vector.broadcast %cst_13 : f32 to vector<8x128xf32>
    %26 = arith.maximumf %24, %25 : vector<8x128xf32>
    %c1_i32_14 = arith.constant 1 : i32
    %27 = tpu.dynamic_rotate %26 by %c1_i32_14 dim 1 : vector<8x128xf32>, i32 -> vector<8x128xf32>
    %cst_15 = arith.constant 0.000000e+00 : f32
    %28 = vector.shape_cast %2 : vector<1x128xi1> to vector<1x128xi1>
    %29 = vector.broadcast %28 : vector<1x128xi1> to vector<8x128xi1>
    %30 = vector.broadcast %cst_15 : f32 to vector<8x128xf32>
    %31 = arith.select %29, %27, %30 : vector<8x128xi1>, vector<8x128xf32>
    %c127_i32_16 = arith.constant 127 : i32
    %32 = tpu.dynamic_rotate %26 by %c127_i32_16 dim 1 : vector<8x128xf32>, i32 -> vector<8x128xf32>
    %cst_17 = arith.constant 0.000000e+00 : f32
    %33 = vector.shape_cast %4 : vector<1x128xi1> to vector<1x128xi1>
    %34 = vector.broadcast %33 : vector<1x128xi1> to vector<8x128xi1>
    %35 = vector.broadcast %cst_17 : f32 to vector<8x128xf32>
    %36 = arith.select %34, %32, %35 : vector<8x128xi1>, vector<8x128xf32>
    %37 = tpu.concatenate %31, %26, %36 in 0 : vector<8x128xf32>, vector<8x128xf32>, vector<8x128xf32> -> vector<24x128xf32>
    %cst_18 = arith.constant dense<0.000000e+00> : vector<8x128xf32>
    %38 = tpu.matmul %6, %37, %cst_18 {dimension_numbers = #tpu.dot_dimension_numbers<[1], [0], [0], [1], [0, 0, 1, 1], [], []>} : vector<8x24xf32>, vector<24x128xf32>, vector<8x128xf32> -> vector<8x128xf32>
    %39 = vector.broadcast %8 : vector<8x1xf32> to vector<8x128xf32>
    %40 = arith.addf %38, %39 : vector<8x128xf32>
    %41 = arith.addf %40, %10 : vector<8x128xf32>
    %cst_19 = arith.constant 0.000000e+00 : f32
    %42 = vector.broadcast %cst_19 : f32 to vector<8x128xf32>
    %43 = arith.maximumf %41, %42 : vector<8x128xf32>
    %c0_20 = arith.constant 0 : index
    %c0_21 = arith.constant 0 : index
    %c0_22 = arith.constant 0 : index
    %44 = vector.load %arg6[%c0_20, %c0_21, %c0_22] : memref<2x8x128xf32, #tpu.memory_space<vmem>>, vector<1x8x128xf32>
    %45 = vector.shape_cast %44 : vector<1x8x128xf32> to vector<8x128xf32>
    %46 = vector.shape_cast %43 : vector<8x128xf32> to vector<1x8x128xf32>
    tpu.vector_store %arg6[%c0_20, %c0_21, %c0_22], %46 {strides = array<i32>} : memref<2x8x128xf32, #tpu.memory_space<vmem>>, vector<1x8x128xf32>,
    %c1 = arith.constant 1 : index
    %c0_23 = arith.constant 0 : index
    %c0_24 = arith.constant 0 : index
    %47 = vector.load %arg1[%c1, %c0_23, %c0_24] : memref<2x8x128xf32, #tpu.memory_space<vmem>>, vector<1x8x128xf32>
    %48 = vector.shape_cast %47 : vector<1x8x128xf32> to vector<8x128xf32>
    %c1_i32_25 = arith.constant 1 : i32
    %49 = tpu.dynamic_rotate %48 by %c1_i32_25 dim 1 : vector<8x128xf32>, i32 -> vector<8x128xf32>
    %cst_26 = arith.constant 0.000000e+00 : f32
    %50 = vector.shape_cast %2 : vector<1x128xi1> to vector<1x128xi1>
    %51 = vector.broadcast %50 : vector<1x128xi1> to vector<8x128xi1>
    %52 = vector.broadcast %cst_26 : f32 to vector<8x128xf32>
    %53 = arith.select %51, %49, %52 : vector<8x128xi1>, vector<8x128xf32>
    %c127_i32_27 = arith.constant 127 : i32
    %54 = tpu.dynamic_rotate %48 by %c127_i32_27 dim 1 : vector<8x128xf32>, i32 -> vector<8x128xf32>
    %cst_28 = arith.constant 0.000000e+00 : f32
    %55 = vector.shape_cast %4 : vector<1x128xi1> to vector<1x128xi1>
    %56 = vector.broadcast %55 : vector<1x128xi1> to vector<8x128xi1>
    %57 = vector.broadcast %cst_28 : f32 to vector<8x128xf32>
    %58 = arith.select %56, %54, %57 : vector<8x128xi1>, vector<8x128xf32>
    %59 = tpu.concatenate %53, %48, %58 in 0 : vector<8x128xf32>, vector<8x128xf32>, vector<8x128xf32> -> vector<24x128xf32>
    %cst_29 = arith.constant dense<0.000000e+00> : vector<8x128xf32>
    %60 = tpu.matmul %5, %59, %cst_29 {dimension_numbers = #tpu.dot_dimension_numbers<[1], [0], [0], [1], [0, 0, 1, 1], [], []>} : vector<8x24xf32>, vector<24x128xf32>, vector<8x128xf32> -> vector<8x128xf32>
    %61 = vector.broadcast %7 : vector<8x1xf32> to vector<8x128xf32>
    %62 = arith.addf %60, %61 : vector<8x128xf32>
    %cst_30 = arith.constant 0.000000e+00 : f32
    %63 = vector.broadcast %cst_30 : f32 to vector<8x128xf32>
    %64 = arith.maximumf %62, %63 : vector<8x128xf32>
    %c1_i32_31 = arith.constant 1 : i32
    %65 = tpu.dynamic_rotate %64 by %c1_i32_31 dim 1 : vector<8x128xf32>, i32 -> vector<8x128xf32>
    %cst_32 = arith.constant 0.000000e+00 : f32
    %66 = vector.shape_cast %2 : vector<1x128xi1> to vector<1x128xi1>
    %67 = vector.broadcast %66 : vector<1x128xi1> to vector<8x128xi1>
    %68 = vector.broadcast %cst_32 : f32 to vector<8x128xf32>
    %69 = arith.select %67, %65, %68 : vector<8x128xi1>, vector<8x128xf32>
    %c127_i32_33 = arith.constant 127 : i32
    %70 = tpu.dynamic_rotate %64 by %c127_i32_33 dim 1 : vector<8x128xf32>, i32 -> vector<8x128xf32>
    %cst_34 = arith.constant 0.000000e+00 : f32
    %71 = vector.shape_cast %4 : vector<1x128xi1> to vector<1x128xi1>
    %72 = vector.broadcast %71 : vector<1x128xi1> to vector<8x128xi1>
    %73 = vector.broadcast %cst_34 : f32 to vector<8x128xf32>
    %74 = arith.select %72, %70, %73 : vector<8x128xi1>, vector<8x128xf32>
    %75 = tpu.concatenate %69, %64, %74 in 0 : vector<8x128xf32>, vector<8x128xf32>, vector<8x128xf32> -> vector<24x128xf32>
    %cst_35 = arith.constant dense<0.000000e+00> : vector<8x128xf32>
    %76 = tpu.matmul %6, %75, %cst_35 {dimension_numbers = #tpu.dot_dimension_numbers<[1], [0], [0], [1], [0, 0, 1, 1], [], []>} : vector<8x24xf32>, vector<24x128xf32>, vector<8x128xf32> -> vector<8x128xf32>
    %77 = vector.broadcast %8 : vector<8x1xf32> to vector<8x128xf32>
    %78 = arith.addf %76, %77 : vector<8x128xf32>
    %79 = arith.addf %78, %48 : vector<8x128xf32>
    %cst_36 = arith.constant 0.000000e+00 : f32
    %80 = vector.broadcast %cst_36 : f32 to vector<8x128xf32>
    %81 = arith.maximumf %79, %80 : vector<8x128xf32>
    %c1_37 = arith.constant 1 : index
    %c0_38 = arith.constant 0 : index
    %c0_39 = arith.constant 0 : index
    %82 = vector.load %arg6[%c1_37, %c0_38, %c0_39] : memref<2x8x128xf32, #tpu.memory_space<vmem>>, vector<1x8x128xf32>
    %83 = vector.shape_cast %82 : vector<1x8x128xf32> to vector<8x128xf32>
    %84 = vector.shape_cast %81 : vector<8x128xf32> to vector<1x8x128xf32>
    tpu.vector_store %arg6[%c1_37, %c0_38, %c0_39], %84 {strides = array<i32>} : memref<2x8x128xf32, #tpu.memory_space<vmem>>, vector<1x8x128xf32>,
    return
  }
  func.func @transform_0(%arg0: i32) -> (i32, i32, i32) {
    %c0_i32 = arith.constant 0 : i32
    %c0_i32_0 = arith.constant 0 : i32
    %c0_i32_1 = arith.constant 0 : i32
    return %arg0, %c0_i32, %c0_i32_0 : i32, i32, i32
  }
  func.func @transform_1(%arg0: i32) -> (i32, i32) {
    %c0_i32 = arith.constant 0 : i32
    %c0_i32_0 = arith.constant 0 : i32
    %c0_i32_1 = arith.constant 0 : i32
    return %c0_i32, %c0_i32_0 : i32, i32
  }
  func.func @transform_2(%arg0: i32) -> (i32, i32) {
    %c0_i32 = arith.constant 0 : i32
    %c0_i32_0 = arith.constant 0 : i32
    %c0_i32_1 = arith.constant 0 : i32
    return %c0_i32, %c0_i32_0 : i32, i32
  }
  func.func @transform_3(%arg0: i32) -> (i32, i32) {
    %c0_i32 = arith.constant 0 : i32
    %c0_i32_0 = arith.constant 0 : i32
    %c0_i32_1 = arith.constant 0 : i32
    return %c0_i32, %c0_i32_0 : i32, i32
  }
  func.func @transform_4(%arg0: i32) -> (i32, i32) {
    %c0_i32 = arith.constant 0 : i32
    %c0_i32_0 = arith.constant 0 : i32
    %c0_i32_1 = arith.constant 0 : i32
    return %c0_i32, %c0_i32_0 : i32, i32
  }
  func.func @transform_5(%arg0: i32) -> (i32, i32, i32) {
    %c0_i32 = arith.constant 0 : i32
    %c0_i32_0 = arith.constant 0 : i32
    %c0_i32_1 = arith.constant 0 : i32
    return %arg0, %c0_i32, %c0_i32_0 : i32, i32, i32
  }
}

</mosaic_0001>

<llo_original>
// kernel: tpu_custom_call.1
$region0: #{tpu_custom_call.1}
  #allocation0 [shape = 'u32[]', space=smem, size = 0x4, offset = 0x4, fixed_abs, tag = 'smem constant byte address 0x4 - core index']
  #allocation1 [shape = 'u32[144,128]{1,0:T(1,128)}', space=vmem, size = 0x12000, scoped, tag = 'internal scratch']
  %s0 = inlined_call_operand.hbm [shape: f32[4,8,128], index: 0, kind: input, shape index: {}]
  %s1 = inlined_call_operand.vmem [shape: f32[8,24], index: 1, kind: input, shape index: {}]
  %s2 = inlined_call_operand.vmem [shape: f32[8,1], index: 2, kind: input, shape index: {}]
  %s3 = inlined_call_operand.vmem [shape: f32[8,24], index: 3, kind: input, shape index: {}]
  %s4 = inlined_call_operand.vmem [shape: f32[8,1], index: 4, kind: input, shape index: {}]
  %s5 = inlined_call_operand.hbm [shape: f32[4,8,128], index: 5, kind: output, shape index: {}]
  %s6 = sld [smem:[#allocation0]]
  $region57: #{tpu_custom_call.1} parent=0
    _
  %s8 = ssub.s32 1, %s6
  %s9 = scalar_select 0, %s8, %s6
  $region1: #{tpu_custom_call.1} parent=0
    #allocation2 [shape = 'u8[16384]{0}', space=vmem, size = 0x4000, scoped, tag = 'input window, operand 0']
    #allocation3 [shape = 's32[2]{0}', space=sflag, size = 0x8, scoped, tag = 'scoped memory for tpu_custom_call.1']
    #allocation4 [shape = 's32[2]{0}', space=sflag, size = 0x8, scoped, tag = 'scoped memory for tpu_custom_call.1']
    #allocation5 [shape = 'u8[16384]{0}', space=vmem, size = 0x4000, scoped, tag = 'output window, operand 0']
    %10 = vsyncpa [#allocation3], 0
    %s11 = scalar_lea.sflag [#allocation3], 1
    %12 = vsyncpa %s11, 0
    %13 = vsyncpa [#allocation4], 0
    %s14 = scalar_lea.sflag [#allocation4], 1
    %15 = vsyncpa %s14, 0
    loop: start=0, step=1, limit=4
    $region2: #{tpu_custom_call.1} parent=1 // loop_pre_header
      _
    $region3: #{tpu_custom_call.1} parent=1 // loop_header
      %s17 = sphi 0, %s21
      %p18 = scmp.ge.s32.totalorder %s17, 4
      %s27 = sphi 0, %s29
      %s30 = sphi 0, %s27
      %s31 = sphi 0, %s30
      %s47 = sphi 0, %s31
      %s51 = sphi 0, %s51
      %s53 = sphi 0, %s51
      %s54 = sphi 0, %s53
      %s68 = sphi 0, %s54
      %s72 = sphi 0, %s72
      %s74 = sphi 0, %s72
      %s75 = sphi 0, %s74
      %s89 = sphi 0, %s75
      %s93 = sphi 0, %s93
      %s95 = sphi 0, %s93
      %s96 = sphi 0, %s95
      %s110 = sphi 0, %s96
      %s114 = sphi 0, %s114
      %s116 = sphi 0, %s114
      %s117 = sphi 0, %s116
      %s131 = sphi 0, %s117
      %s137 = sphi 0, %s139
      %s140 = sphi 0, %s137
      %s141 = sphi 0, %s140
      %s157 = sphi 0, %s141
    $region4: #{tpu_custom_call.1} parent=1 // loop_header_branch
      %20 = sbr.rel (%p18) target = $region8
    $region5: #{tpu_custom_call.1} parent=1 // loop_body
      %s22 = ssub.s32 %s17, 1
      %s23 = ssub.s32 %s17, 2
      %s24 = sadd.s32 %s17, 1
      %s25 = ssub.s32 %s17, %s24
      %p26 = scmp.eq.s32.totalorder %s25, 0
      %s28 = sadd.s32 %s27, 1
      %s29 = scalar_select %p26, %s27, %s28
      %p32 = pneg %p26
      %p33 = scmp.eq.s32.totalorder %s17, 1
      %p34 = por %p32, %p33
      %p35 = scmp.ne.s32.totalorder %s27, %s30
      %p36 = scmp.eq.s32.totalorder %s17, 0
      %p37 = por %p35, %p36
      %p38 = scmp.ne.s32.totalorder %s27, %s30
      %p39 = scmp.eq.s32.totalorder %s22, 1
      %p40 = por %p38, %p39
      %p41 = scmp.ne.s32.totalorder %s30, %s31
      %p42 = scmp.eq.s32.totalorder %s22, 0
      %p43 = por %p41, %p42
      %p44 = scmp.ne.s32.totalorder %s30, %s31
      %p45 = scmp.eq.s32.totalorder %s23, 1
      %p46 = por %p44, %p45
      %p48 = scmp.ne.s32.totalorder %s31, %s47
      %p49 = scmp.eq.s32.totalorder %s23, 0
      %p50 = por %p48, %p49
      %s52 = sadd.s32 %s51, 1
      %p55 = scmp.eq.s32.totalorder %s17, 1
      %p56 = scmp.ne.s32.totalorder %s51, %s53
      %p57 = scmp.eq.s32.totalorder %s17, 0
      %p58 = por %p56, %p57
      %p59 = scmp.ne.s32.totalorder %s51, %s53
      %p60 = scmp.eq.s32.totalorder %s22, 1
      %p61 = por %p59, %p60
      %p62 = scmp.ne.s32.totalorder %s53, %s54
      %p63 = scmp.eq.s32.totalorder %s22, 0
      %p64 = por %p62, %p63
      %p65 = scmp.ne.s32.totalorder %s53, %s54
      %p66 = scmp.eq.s32.totalorder %s23, 1
      %p67 = por %p65, %p66
      %p69 = scmp.ne.s32.totalorder %s54, %s68
      %p70 = scmp.eq.s32.totalorder %s23, 0
      %p71 = por %p69, %p70
      %s73 = sadd.s32 %s72, 1
      %p76 = scmp.eq.s32.totalorder %s17, 1
      %p77 = scmp.ne.s32.totalorder %s72, %s74
      %p78 = scmp.eq.s32.totalorder %s17, 0
      %p79 = por %p77, %p78
      %p80 = scmp.ne.s32.totalorder %s72, %s74
      %p81 = scmp.eq.s32.totalorder %s22, 1
      %p82 = por %p80, %p81
      %p83 = scmp.ne.s32.totalorder %s74, %s75
      %p84 = scmp.eq.s32.totalorder %s22, 0
      %p85 = por %p83, %p84
      %p86 = scmp.ne.s32.totalorder %s74, %s75
      %p87 = scmp.eq.s32.totalorder %s23, 1
      %p88 = por %p86, %p87
      %p90 = scmp.ne.s32.totalorder %s75, %s89
      %p91 = scmp.eq.s32.totalorder %s23, 0
      %p92 = por %p90, %p91
      %s94 = sadd.s32 %s93, 1
      %p97 = scmp.eq.s32.totalorder %s17, 1
      %p98 = scmp.ne.s32.totalorder %s93, %s95
      %p99 = scmp.eq.s32.totalorder %s17, 0
      %p100 = por %p98, %p99
      %p101 = scmp.ne.s32.totalorder %s93, %s95
      %p102 = scmp.eq.s32.totalorder %s22, 1
      %p103 = por %p101, %p102
      %p104 = scmp.ne.s32.totalorder %s95, %s96
      %p105 = scmp.eq.s32.totalorder %s22, 0
      %p106 = por %p104, %p105
      %p107 = scmp.ne.s32.totalorder %s95, %s96
      %p108 = scmp.eq.s32.totalorder %s23, 1
      %p109 = por %p107, %p108
      %p111 = scmp.ne.s32.totalorder %s96, %s110
      %p112 = scmp.eq.s32.totalorder %s23, 0
      %p113 = por %p111, %p112
      %s115 = sadd.s32 %s114, 1
      %p118 = scmp.eq.s32.totalorder %s17, 1
      %p119 = scmp.ne.s32.totalorder %s114, %s116
      %p120 = scmp.eq.s32.totalorder %s17, 0
      %p121 = por %p119, %p120
      %p122 = scmp.ne.s32.totalorder %s114, %s116
      %p123 = scmp.eq.s32.totalorder %s22, 1
      %p124 = por %p122, %p123
      %p125 = scmp.ne.s32.totalorder %s116, %s117
      %p126 = scmp.eq.s32.totalorder %s22, 0
      %p127 = por %p125, %p126
      %p128 = scmp.ne.s32.totalorder %s116, %s117
      %p129 = scmp.eq.s32.totalorder %s23, 1
      %p130 = por %p128, %p129
      %p132 = scmp.ne.s32.totalorder %s117, %s131
      %p133 = scmp.eq.s32.totalorder %s23, 0
      %p134 = por %p132, %p133
      %s135 = ssub.s32 %s17, %s24
      %p136 = scmp.eq.s32.totalorder %s135, 0
      %s138 = sadd.s32 %s137, 1
      %s139 = scalar_select %p136, %s137, %s138
      %p142 = pneg %p136
      %p143 = scmp.eq.s32.totalorder %s17, 1
      %p144 = por %p142, %p143
      %p145 = scmp.ne.s32.totalorder %s137, %s140
      %p146 = scmp.eq.s32.totalorder %s17, 0
      %p147 = por %p145, %p146
      %p148 = scmp.ne.s32.totalorder %s137, %s140
      %p149 = scmp.eq.s32.totalorder %s22, 1
      %p150 = por %p148, %p149
      %p151 = scmp.ne.s32.totalorder %s140, %s141
      %p152 = scmp.eq.s32.totalorder %s22, 0
      %p153 = por %p151, %p152
      %p154 = scmp.ne.s32.totalorder %s140, %s141
      %p155 = scmp.eq.s32.totalorder %s23, 1
      %p156 = por %p154, %p155
      %p158 = scmp.ne.s32.totalorder %s141, %s157
      %p159 = scmp.eq.s32.totalorder %s23, 0
      %p160 = por %p158, %p159
      %p161 = scmp.le.s32.totalorder 1, %s17
      %p162 = scmp.lt.s32.totalorder %s17, 3
      %p163 = pnand %p161, %p162
      %p164 = pneg %p163
      // Predicated region
      $region9: #{tpu_custom_call.1} parent=5 // pred_check
        _
      $region10: #{tpu_custom_call.1} parent=5 // pred_check_branch
        %166 = sbr.rel (%p163) target = $region12
      $region11: #{tpu_custom_call.1} parent=5 // pred_region
        %s167 = ssub.s32 %s17, 1
        // Predicated region
        $region13: #{tpu_custom_call.1} parent=11 // pred_check
          %p168 = pneg %p64
        $region14: #{tpu_custom_call.1} parent=11 // pred_check_branch
          %170 = sbr.rel (%p168) target = $region16
        $region15: #{tpu_custom_call.1} parent=11 // pred_region
          _
        $region16: #{tpu_custom_call.1} parent=11 // pred_fallthru
          _
        // Predicated region
        $region17: #{tpu_custom_call.1} parent=11 // pred_check
          %p171 = pneg %p85
        $region18: #{tpu_custom_call.1} parent=11 // pred_check_branch
          %173 = sbr.rel (%p171) target = $region20
        $region19: #{tpu_custom_call.1} parent=11 // pred_region
          _
        $region20: #{tpu_custom_call.1} parent=11 // pred_fallthru
          _
        // Predicated region
        $region21: #{tpu_custom_call.1} parent=11 // pred_check
          %p174 = pneg %p106
        $region22: #{tpu_custom_call.1} parent=11 // pred_check_branch
          %176 = sbr.rel (%p174) target = $region24
        $region23: #{tpu_custom_call.1} parent=11 // pred_region
          _
        $region24: #{tpu_custom_call.1} parent=11 // pred_fallthru
          _
        // Predicated region
        $region25: #{tpu_custom_call.1} parent=11 // pred_check
          %p177 = pneg %p127
        $region26: #{tpu_custom_call.1} parent=11 // pred_check_branch
          %179 = sbr.rel (%p177) target = $region28
        $region27: #{tpu_custom_call.1} parent=11 // pred_region
          _
        $region28: #{tpu_custom_call.1} parent=11 // pred_fallthru
          _
      $region12: #{tpu_custom_call.1} parent=5 // pred_fallthru
        _
      %p180 = scmp.lt.s32.totalorder %s17, 2
      // Predicated region
      $region29: #{tpu_custom_call.1} parent=5 // pred_check
        %p181 = pneg %p180
      $region30: #{tpu_custom_call.1} parent=5 // pred_check_branch
        %183 = sbr.rel (%p181) target = $region32
      $region31: #{tpu_custom_call.1} parent=5 // pred_region
        // Predicated region
        $region33: #{tpu_custom_call.1} parent=31 // pred_check
          %p184 = pneg %p37
        $region34: #{tpu_custom_call.1} parent=31 // pred_check_branch
          %186 = sbr.rel (%p184) target = $region36
        $region35: #{tpu_custom_call.1} parent=31 // pred_region
          %s187 = sand.u32 %s27, 1
          %s188 = scalar_lea.sflag [#allocation3], %s187
          %s189 = sand.u32 %s27, 1
          %s190 = smul.addr %s189, 16
          %s191 = scalar_lea.vmem [#allocation2], %s190
          %s192 = smul.u32 2, %s17
          %s194 = ssub.s32 256, 256
          %195 = vsyncadd %s188, %s194
          %s196 = smul.addr %s192, 128
          %s197 = scalar_lea.hbm %s0, %s196
          %s198 = sshll.u32 %s191, 4
          %s199 = int_to_ptr.vmem [resolvable:$true] %s198
          %204 = dma.hbm_to_vmem [thread:$0]  %s197, 256, %s199, %s188, 128, 128, 8
        $region36: #{tpu_custom_call.1} parent=31 // pred_fallthru
          _
      $region32: #{tpu_custom_call.1} parent=5 // pred_fallthru
        _
      %p205 = scmp.le.s32.totalorder 1, %s17
      %p206 = scmp.lt.s32.totalorder %s17, 3
      %p207 = pnand %p205, %p206
      %p208 = pneg %p207
      // Predicated region
      $region37: #{tpu_custom_call.1} parent=5 // pred_check
        _
      $region38: #{tpu_custom_call.1} parent=5 // pred_check_branch
        %210 = sbr.rel (%p207) target = $region40
      $region39: #{tpu_custom_call.1} parent=5 // pred_region
        %s211 = ssub.s32 %s17, 1
        %s212 = sand.u32 %s30, 1
        %s213 = scalar_lea.sflag [#allocation3], %s212
        %s214 = sand.u32 %s30, 1
        %s215 = smul.addr %s214, 16
        %s216 = scalar_lea.vmem [#allocation2], %s215
        // Predicated region
        $region41: #{tpu_custom_call.1} parent=39 // pred_check
          %p217 = pneg %p43
        $region42: #{tpu_custom_call.1} parent=39 // pred_check_branch
          %219 = sbr.rel (%p217) target = $region44
        $region43: #{tpu_custom_call.1} parent=39 // pred_region
          %220 = dma.done %s213, 256
        $region44: #{tpu_custom_call.1} parent=39 // pred_fallthru
          _
        %s221 = sand.u32 %s30, 1
        %s222 = scalar_lea.sflag [#allocation3], %s221
        %s223 = sand.u32 %s30, 1
        %s224 = smul.addr %s223, 16
        %s225 = scalar_lea.vmem [#allocation2], %s224
        %p226 = pneg %p43
        %p227 = pneg %p40
        %p228 = pneg %p64
        %p229 = pneg %p61
        %p230 = pneg %p85
        %p231 = pneg %p82
        %p232 = pneg %p106
        %p233 = pneg %p103
        %p234 = pneg %p127
        %p235 = pneg %p124
        %p236 = pneg %p153
        %p237 = pneg %p150
        %s238 = sand.u32 %s140, 1
        %s239 = scalar_lea.sflag [#allocation4], %s238
        %s240 = sand.u32 %s140, 1
        %s241 = smul.addr %s240, 16
        %s242 = scalar_lea.vmem [#allocation5], %s241
        %s243 = smul.u32 2, %s22
        %s244 = smul.u32 2, %s22
        %v245 = vlaneseq
        %v246 = vand.u32 %v245, 127
        %vm247 = vcmp.ne.s32.totalorder %v246, 0
        %vm248 = vcmp.ne.s32.totalorder %v246, 127
        %v249 = vld [vmem:[%s1] sm:$0xff]
        %v250 = vld [vmem:[%s3] sm:$0xff]
        %v251 = vld [vmem:[%s2] sm:$0xff]
        %v252 = vld [vmem:[%s4] sm:$0xff]
        %v253 = vld [vmem:[%s216] sm:$0xff]
        %254 = vrot.lane.b32.xlu0 %v253, 1
        %v255 = vpop.permute.xlu0 %254
        %v256 = vsel %vm247, 1, 0
        %vm257 = vcmp.eq.s32.totalorder %v256, 1
        %v258 = vsel %vm257, %v255, 0.0
        %259 = vrot.lane.b32.xlu0 %v253, 127
        %v260 = vpop.permute.xlu0 %259
        %v261 = vsel %vm248, 1, 0
        %vm262 = vcmp.eq.s32.totalorder %v261, 1
        %v263 = vsel %vm262, %v260, 0.0
        %265 = vset.pattern.permute.xlu0 0
        %266 = vperm.xlu0 %265, %v251
        %v267 = vpop.permute.xlu0 %266
        %vm269 = vcmask 195584
        %v271 = vsel %vm269, %v249, 0
        %273 = vmatprep.subr.mxu0 0.0
        %274 = vmatpush1.msra.mxu0 0.0
        %275 = vmatprep.subr.mxu0 0.0
        %276 = vmatpush1.msra.mxu0 0.0
        %277 = vmatprep.subr.mxu0 0.0
        %278 = vmatpush1.msra.mxu0 0.0
        %279 = vmatprep.subr.mxu0 0.0
        %280 = vmatpush1.msra.mxu0 0.0
        %281 = vmatprep.subr.mxu0 0.0
        %282 = vmatpush1.msra.mxu0 0.0
        %283 = vmatprep.subr.mxu0 0.0
        %284 = vmatpush1.msra.mxu0 0.0
        %285 = vmatprep.subr.mxu0 0.0
        %286 = vmatpush1.msra.mxu0 0.0
        %287 = vmatprep.subr.mxu0 0.0
        %288 = vmatpush1.msra.mxu0 0.0
        %289 = vmatprep.subr.mxu0 0.0
        %290 = vmatpush1.msra.mxu0 0.0
        %291 = vmatprep.subr.mxu0 0.0
        %292 = vmatpush1.msra.mxu0 0.0
        %293 = vmatprep.subr.mxu0 0.0
        %294 = vmatpush1.msra.mxu0 0.0
        %295 = vmatprep.subr.mxu0 0.0
        %296 = vmatpush1.msra.mxu0 0.0
        %297 = vmatprep.subr.mxu0 0.0
        %298 = vmatpush1.msra.mxu0 0.0
        %299 = vmatprep.subr.mxu0 0.0
        %300 = vmatpush1.msra.mxu0 %v263
        %301 = vmatprep.subr.mxu0 0.0
        %302 = vmatpush1.msra.mxu0 %v253
        %303 = vmatprep.subr.mxu0 0.0
        %304 = vmatpush1.msra.mxu0 %v258
        %305 = vmatprep.subr.mxu0 0.0
        %306 = vmatpush2.msra.mxu0 0.0
        %307 = vmatprep.subr.mxu0 0.0
        %308 = vmatpush2.msra.mxu0 0.0
        %309 = vmatprep.subr.mxu0 0.0
        %310 = vmatpush2.msra.mxu0 0.0
        %311 = vmatprep.subr.mxu0 0.0
        %312 = vmatpush2.msra.mxu0 0.0
        %313 = vmatprep.subr.mxu0 0.0
        %314 = vmatpush2.msra.mxu0 0.0
        %315 = vmatprep.subr.mxu0 0.0
        %316 = vmatpush2.msra.mxu0 0.0
        %317 = vmatprep.subr.mxu0 0.0
        %318 = vmatpush2.msra.mxu0 0.0
        %319 = vmatprep.subr.mxu0 0.0
        %320 = vmatpush2.msra.mxu0 0.0
        %321 = vmatprep.subr.mxu0 0.0
        %322 = vmatpush2.msra.mxu0 0.0
        %323 = vmatprep.subr.mxu0 0.0
        %324 = vmatpush2.msra.mxu0 0.0
        %325 = vmatprep.subr.mxu0 0.0
        %326 = vmatpush2.msra.mxu0 0.0
        %327 = vmatprep.subr.mxu0 0.0
        %328 = vmatpush2.msra.mxu0 0.0
        %329 = vmatprep.subr.mxu0 0.0
        %330 = vmatpush2.msra.mxu0 0.0
        %331 = vmatprep.subr.mxu0 0.0
        %332 = vmatpush2.msra.mxu0 0.0
        %333 = vmatprep.subr.mxu0 0.0
        %334 = vmatpush2.msra.mxu0 0.0
        %335 = vmatprep.subr.mxu0 0.0
        %336 = vmatpush2.msra.mxu0 0.0
        %337 = vmatprep.mubr.f32.mxu0 0.0
        %338 = vmatmul.mubr.f32.gmra.mxu0 %v271
        %v339 = vpop.f32.mrf.mxu0
        %v340 = vadd.f32 %v267, %v339
        %v341 = vpop.f32.mrf.mxu0
        %342 = vdwg.mxu0
        %v343 = vmax.f32 %v340, 0.0
        %344 = vrot.lane.b32.xlu0 %v343, 1
        %v345 = vpop.permute.xlu0 %344
        %v346 = vsel %vm257, %v345, 0.0
        %347 = vrot.lane.b32.xlu0 %v343, 127
        %v348 = vpop.permute.xlu0 %347
        %v349 = vsel %vm262, %v348, 0.0
        %351 = vset.pattern.permute.xlu0 0
        %352 = vperm.xlu0 %351, %v252
        %v353 = vpop.permute.xlu0 %352
        %v356 = vsel %vm269, %v250, 0
        %358 = vmatprep.subr.mxu0 0.0
        %359 = vmatpush1.msra.mxu0 0.0
        %360 = vmatprep.subr.mxu0 0.0
        %361 = vmatpush1.msra.mxu0 0.0
        %362 = vmatprep.subr.mxu0 0.0
        %363 = vmatpush1.msra.mxu0 0.0
        %364 = vmatprep.subr.mxu0 0.0
        %365 = vmatpush1.msra.mxu0 0.0
        %366 = vmatprep.subr.mxu0 0.0
        %367 = vmatpush1.msra.mxu0 0.0
        %368 = vmatprep.subr.mxu0 0.0
        %369 = vmatpush1.msra.mxu0 0.0
        %370 = vmatprep.subr.mxu0 0.0
        %371 = vmatpush1.msra.mxu0 0.0
        %372 = vmatprep.subr.mxu0 0.0
        %373 = vmatpush1.msra.mxu0 0.0
        %374 = vmatprep.subr.mxu0 0.0
        %375 = vmatpush1.msra.mxu0 0.0
        %376 = vmatprep.subr.mxu0 0.0
        %377 = vmatpush1.msra.mxu0 0.0
        %378 = vmatprep.subr.mxu0 0.0
        %379 = vmatpush1.msra.mxu0 0.0
        %380 = vmatprep.subr.mxu0 0.0
        %381 = vmatpush1.msra.mxu0 0.0
        %382 = vmatprep.subr.mxu0 0.0
        %383 = vmatpush1.msra.mxu0 0.0
        %384 = vmatprep.subr.mxu0 0.0
        %385 = vmatpush1.msra.mxu0 %v349
        %386 = vmatprep.subr.mxu0 0.0
        %387 = vmatpush1.msra.mxu0 %v343
        %388 = vmatprep.subr.mxu0 0.0
        %389 = vmatpush1.msra.mxu0 %v346
        %390 = vmatprep.subr.mxu0 0.0
        %391 = vmatpush2.msra.mxu0 0.0
        %392 = vmatprep.subr.mxu0 0.0
        %393 = vmatpush2.msra.mxu0 0.0
        %394 = vmatprep.subr.mxu0 0.0
        %395 = vmatpush2.msra.mxu0 0.0
        %396 = vmatprep.subr.mxu0 0.0
        %397 = vmatpush2.msra.mxu0 0.0
        %398 = vmatprep.subr.mxu0 0.0
        %399 = vmatpush2.msra.mxu0 0.0
        %400 = vmatprep.subr.mxu0 0.0
        %401 = vmatpush2.msra.mxu0 0.0
        %402 = vmatprep.subr.mxu0 0.0
        %403 = vmatpush2.msra.mxu0 0.0
        %404 = vmatprep.subr.mxu0 0.0
        %405 = vmatpush2.msra.mxu0 0.0
        %406 = vmatprep.subr.mxu0 0.0
        %407 = vmatpush2.msra.mxu0 0.0
        %408 = vmatprep.subr.mxu0 0.0
        %409 = vmatpush2.msra.mxu0 0.0
        %410 = vmatprep.subr.mxu0 0.0
        %411 = vmatpush2.msra.mxu0 0.0
        %412 = vmatprep.subr.mxu0 0.0
        %413 = vmatpush2.msra.mxu0 0.0
        %414 = vmatprep.subr.mxu0 0.0
        %415 = vmatpush2.msra.mxu0 0.0
        %416 = vmatprep.subr.mxu0 0.0
        %417 = vmatpush2.msra.mxu0 0.0
        %418 = vmatprep.subr.mxu0 0.0
        %419 = vmatpush2.msra.mxu0 0.0
        %420 = vmatprep.subr.mxu0 0.0
        %421 = vmatpush2.msra.mxu0 0.0
        %422 = vmatprep.mubr.f32.mxu0 0.0
        %423 = vmatmul.mubr.f32.gmra.mxu0 %v356
        %v424 = vpop.f32.mrf.mxu0
        %v425 = vadd.f32 %v353, %v424
        %v426 = vpop.f32.mrf.mxu0
        %427 = vdwg.mxu0
        %v428 = vadd.f32 %v425, %v253
        %v429 = vmax.f32 %v428, 0.0
        %430 = vst [vmem:[%s242] sm:$0xff] %v429
        %s431 = scalar_lea.vmem %s216, 8 [#allocation2]
        %v432 = vld [vmem:[%s431] sm:$0xff]
        %433 = vrot.lane.b32.xlu0 %v432, 1
        %v434 = vpop.permute.xlu0 %433
        %v435 = vsel %vm257, %v434, 0.0
        %436 = vrot.lane.b32.xlu0 %v432, 127
        %v437 = vpop.permute.xlu0 %436
        %v438 = vsel %vm262, %v437, 0.0
        %439 = vmatprep.subr.mxu0 0.0
        %440 = vmatpush1.msra.mxu0 0.0
        %441 = vmatprep.subr.mxu0 0.0
        %442 = vmatpush1.msra.mxu0 0.0
        %443 = vmatprep.subr.mxu0 0.0
        %444 = vmatpush1.msra.mxu0 0.0
        %445 = vmatprep.subr.mxu0 0.0
        %446 = vmatpush1.msra.mxu0 0.0
        %447 = vmatprep.subr.mxu0 0.0
        %448 = vmatpush1.msra.mxu0 0.0
        %449 = vmatprep.subr.mxu0 0.0
        %450 = vmatpush1.msra.mxu0 0.0
        %451 = vmatprep.subr.mxu0 0.0
        %452 = vmatpush1.msra.mxu0 0.0
        %453 = vmatprep.subr.mxu0 0.0
        %454 = vmatpush1.msra.mxu0 0.0
        %455 = vmatprep.subr.mxu0 0.0
        %456 = vmatpush1.msra.mxu0 0.0
        %457 = vmatprep.subr.mxu0 0.0
        %458 = vmatpush1.msra.mxu0 0.0
        %459 = vmatprep.subr.mxu0 0.0
        %460 = vmatpush1.msra.mxu0 0.0
        %461 = vmatprep.subr.mxu0 0.0
        %462 = vmatpush1.msra.mxu0 0.0
        %463 = vmatprep.subr.mxu0 0.0
        %464 = vmatpush1.msra.mxu0 0.0
        %465 = vmatprep.subr.mxu0 0.0
        %466 = vmatpush1.msra.mxu0 %v438
        %467 = vmatprep.subr.mxu0 0.0
        %468 = vmatpush1.msra.mxu0 %v432
        %469 = vmatprep.subr.mxu0 0.0
        %470 = vmatpush1.msra.mxu0 %v435
        %471 = vmatprep.subr.mxu0 0.0
        %472 = vmatpush2.msra.mxu0 0.0
        %473 = vmatprep.subr.mxu0 0.0
        %474 = vmatpush2.msra.mxu0 0.0
        %475 = vmatprep.subr.mxu0 0.0
        %476 = vmatpush2.msra.mxu0 0.0
        %477 = vmatprep.subr.mxu0 0.0
        %478 = vmatpush2.msra.mxu0 0.0
        %479 = vmatprep.subr.mxu0 0.0
        %480 = vmatpush2.msra.mxu0 0.0
        %481 = vmatprep.subr.mxu0 0.0
        %482 = vmatpush2.msra.mxu0 0.0
        %483 = vmatprep.subr.mxu0 0.0
        %484 = vmatpush2.msra.mxu0 0.0
        %485 = vmatprep.subr.mxu0 0.0
        %486 = vmatpush2.msra.mxu0 0.0
        %487 = vmatprep.subr.mxu0 0.0
        %488 = vmatpush2.msra.mxu0 0.0
        %489 = vmatprep.subr.mxu0 0.0
        %490 = vmatpush2.msra.mxu0 0.0
        %491 = vmatprep.subr.mxu0 0.0
        %492 = vmatpush2.msra.mxu0 0.0
        %493 = vmatprep.subr.mxu0 0.0
        %494 = vmatpush2.msra.mxu0 0.0
        %495 = vmatprep.subr.mxu0 0.0
        %496 = vmatpush2.msra.mxu0 0.0
        %497 = vmatprep.subr.mxu0 0.0
        %498 = vmatpush2.msra.mxu0 0.0
        %499 = vmatprep.subr.mxu0 0.0
        %500 = vmatpush2.msra.mxu0 0.0
        %501 = vmatprep.subr.mxu0 0.0
        %502 = vmatpush2.msra.mxu0 0.0
        %503 = vmatprep.mubr.f32.mxu0 0.0
        %504 = vmatmul.mubr.f32.gmra.mxu0 %v271
        %v505 = vpop.f32.mrf.mxu0
        %v506 = vadd.f32 %v267, %v505
        %v507 = vpop.f32.mrf.mxu0
        %508 = vdwg.mxu0
        %v509 = vmax.f32 %v506, 0.0
        %510 = vrot.lane.b32.xlu0 %v509, 1
        %v511 = vpop.permute.xlu0 %510
        %v512 = vsel %vm257, %v511, 0.0
        %513 = vrot.lane.b32.xlu0 %v509, 127
        %v514 = vpop.permute.xlu0 %513
        %v515 = vsel %vm262, %v514, 0.0
        %516 = vmatprep.subr.mxu0 0.0
        %517 = vmatpush1.msra.mxu0 0.0
        %518 = vmatprep.subr.mxu0 0.0
        %519 = vmatpush1.msra.mxu0 0.0
        %520 = vmatprep.subr.mxu0 0.0
        %521 = vmatpush1.msra.mxu0 0.0
        %522 = vmatprep.subr.mxu0 0.0
        %523 = vmatpush1.msra.mxu0 0.0
        %524 = vmatprep.subr.mxu0 0.0
        %525 = vmatpush1.msra.mxu0 0.0
        %526 = vmatprep.subr.mxu0 0.0
        %527 = vmatpush1.msra.mxu0 0.0
        %528 = vmatprep.subr.mxu0 0.0
        %529 = vmatpush1.msra.mxu0 0.0
        %530 = vmatprep.subr.mxu0 0.0
        %531 = vmatpush1.msra.mxu0 0.0
        %532 = vmatprep.subr.mxu0 0.0
        %533 = vmatpush1.msra.mxu0 0.0
        %534 = vmatprep.subr.mxu0 0.0
        %535 = vmatpush1.msra.mxu0 0.0
        %536 = vmatprep.subr.mxu0 0.0
        %537 = vmatpush1.msra.mxu0 0.0
        %538 = vmatprep.subr.mxu0 0.0
        %539 = vmatpush1.msra.mxu0 0.0
        %540 = vmatprep.subr.mxu0 0.0
        %541 = vmatpush1.msra.mxu0 0.0
        %542 = vmatprep.subr.mxu0 0.0
        %543 = vmatpush1.msra.mxu0 %v515
        %544 = vmatprep.subr.mxu0 0.0
        %545 = vmatpush1.msra.mxu0 %v509
        %546 = vmatprep.subr.mxu0 0.0
        %547 = vmatpush1.msra.mxu0 %v512
        %548 = vmatprep.subr.mxu0 0.0
        %549 = vmatpush2.msra.mxu0 0.0
        %550 = vmatprep.subr.mxu0 0.0
        %551 = vmatpush2.msra.mxu0 0.0
        %552 = vmatprep.subr.mxu0 0.0
        %553 = vmatpush2.msra.mxu0 0.0
        %554 = vmatprep.subr.mxu0 0.0
        %555 = vmatpush2.msra.mxu0 0.0
        %556 = vmatprep.subr.mxu0 0.0
        %557 = vmatpush2.msra.mxu0 0.0
        %558 = vmatprep.subr.mxu0 0.0
        %559 = vmatpush2.msra.mxu0 0.0
        %560 = vmatprep.subr.mxu0 0.0
        %561 = vmatpush2.msra.mxu0 0.0
        %562 = vmatprep.subr.mxu0 0.0
        %563 = vmatpush2.msra.mxu0 0.0
        %564 = vmatprep.subr.mxu0 0.0
        %565 = vmatpush2.msra.mxu0 0.0
        %566 = vmatprep.subr.mxu0 0.0
        %567 = vmatpush2.msra.mxu0 0.0
        %568 = vmatprep.subr.mxu0 0.0
        %569 = vmatpush2.msra.mxu0 0.0
        %570 = vmatprep.subr.mxu0 0.0
        %571 = vmatpush2.msra.mxu0 0.0
        %572 = vmatprep.subr.mxu0 0.0
        %573 = vmatpush2.msra.mxu0 0.0
        %574 = vmatprep.subr.mxu0 0.0
        %575 = vmatpush2.msra.mxu0 0.0
        %576 = vmatprep.subr.mxu0 0.0
        %577 = vmatpush2.msra.mxu0 0.0
        %578 = vmatprep.subr.mxu0 0.0
        %579 = vmatpush2.msra.mxu0 0.0
        %580 = vmatprep.mubr.f32.mxu0 0.0
        %581 = vmatmul.mubr.f32.gmra.mxu0 %v356
        %v582 = vpop.f32.mrf.mxu0
        %v583 = vadd.f32 %v353, %v582
        %v584 = vpop.f32.mrf.mxu0
        %585 = vdwg.mxu0
        %v586 = vadd.f32 %v583, %v432
        %v587 = vmax.f32 %v586, 0.0
        %s588 = scalar_lea.vmem %s242, 8 [#allocation5]
        %589 = vst [vmem:[%s588] sm:$0xff] %v587
        %s590 = sand.u32 %s140, 1
        %s591 = scalar_lea.sflag [#allocation4], %s590
        %s592 = sand.u32 %s140, 1
        %s593 = smul.addr %s592, 16
        %s594 = scalar_lea.vmem [#allocation5], %s593
        // Predicated region
        $region45: #{tpu_custom_call.1} parent=39 // pred_check
          %p595 = pneg %p150
        $region46: #{tpu_custom_call.1} parent=39 // pred_check_branch
          %597 = sbr.rel (%p595) target = $region48
        $region47: #{tpu_custom_call.1} parent=39 // pred_region
          %s598 = smul.u32 2, %s22
          %s600 = ssub.s32 256, 256
          %601 = vsyncadd %s591, %s600
          %s602 = smul.addr %s598, 128
          %s603 = scalar_lea.hbm %s5, %s602
          %s604 = sshll.u32 %s594, 4
          %s605 = int_to_ptr.vmem [resolvable:$true] %s604
          %610 = dma.vmem_to_hbm [thread:$0]  %s605, 256, %s603, %s591, 128, 128, 8
        $region48: #{tpu_custom_call.1} parent=39 // pred_fallthru
          _
      $region40: #{tpu_custom_call.1} parent=5 // pred_fallthru
        _
      %p611 = scmp.le.s32.totalorder 2, %s17
      // Predicated region
      $region49: #{tpu_custom_call.1} parent=5 // pred_check
        %p612 = pneg %p611
      $region50: #{tpu_custom_call.1} parent=5 // pred_check_branch
        %614 = sbr.rel (%p612) target = $region52
      $region51: #{tpu_custom_call.1} parent=5 // pred_region
        %s615 = ssub.s32 %s17, 2
        // Predicated region
        $region53: #{tpu_custom_call.1} parent=51 // pred_check
          %p616 = pneg %p156
        $region54: #{tpu_custom_call.1} parent=51 // pred_check_branch
          %618 = sbr.rel (%p616) target = $region56
        $region55: #{tpu_custom_call.1} parent=51 // pred_region
          %s619 = sand.u32 %s141, 1
          %s620 = scalar_lea.sflag [#allocation4], %s619
          %s621 = sand.u32 %s141, 1
          %s622 = smul.addr %s621, 16
          %s623 = scalar_lea.vmem [#allocation5], %s622
          %624 = dma.done %s620, 256
        $region56: #{tpu_custom_call.1} parent=51 // pred_fallthru
          _
      $region52: #{tpu_custom_call.1} parent=5 // pred_fallthru
        _
    $region6: #{tpu_custom_call.1} parent=1 // loop_footer
      %s21 = sadd.s32 1, %s17
    $region7: #{tpu_custom_call.1} parent=1 // loop_footer_branch
      %16 = sbr.rel target = $region3
    $region8: #{tpu_custom_call.1} parent=1 // loop_exit
      _
    %625 = vsyncpa [#allocation3], 1
    %s626 = scalar_lea.sflag [#allocation3], 1
    %627 = vsyncpa %s626, 1
    %628 = vsyncpa [#allocation4], 1
    %s629 = scalar_lea.sflag [#allocation4], 1
    %630 = vsyncpa %s629, 1

</llo_original>
